<compile_context>
chip_gen: v6e
topology: v6e:2x2x1
jax: 0.10.0
libtpu: 0.0.40
codegen_flags: <defaults>
</compile_context>

<pallas_src>
import functools

import jax
import jax.numpy as jnp
from jax.experimental import pallas as pl
from jax.experimental.pallas import tpu as pltpu


def _round_up(x, m):
    return ((x + m - 1) // m) * m


def _focal_kernel(x_ref, lab_ref, loss_ref, *, gamma):
    # x_ref:   (C, TL)  -- classes on sublanes, pixels on lanes
    # lab_ref: (1, TL)  int32
    # loss_ref:(1, TL)  float32
    x = x_ref[...].astype(jnp.float32)                       # (C, TL)
    m = jnp.max(x, axis=0, keepdims=True)                    # (1, TL)
    z = x - m
    denom = jnp.sum(jnp.exp(z), axis=0, keepdims=True)       # (1, TL)
    log_denom = jnp.log(denom)

    labels = lab_ref[...]                                    # (1, TL)
    cls = jax.lax.broadcasted_iota(jnp.int32, z.shape, dimension=0)
    onehot = (cls == labels).astype(jnp.float32)             # (C, TL)
    z_lab = jnp.sum(onehot * z, axis=0, keepdims=True)       # shifted logit @ label

    log_p = z_lab - log_denom                                # log_softmax @ label
    p = jnp.exp(log_p)                                       # softmax @ label
    s1 = 1.0 - p

    g = float(gamma)
    if g == int(g) and 0 <= int(g) <= 8:
        # integer-gamma fast path (gamma=2 in Eigenlanes): plain VPU multiplies
        w = jnp.ones_like(s1)
        for _ in range(int(g)):
            w = w * s1
    else:
        w = jnp.power(s1, g)

    loss_ref[...] = -(w * log_p)


def softmax_focal_loss(logits, labels, gamma=2.0, reduce=True, tile_lanes=2048):
    """logits: (N, C, H, W) float; labels: (N, H, W) int; returns scalar or (N,H,W)."""
    N, C, H, W = logits.shape
    HW = H * W

    # Layout-preserving views of NCHW; keep logits at native dtype (cast in-kernel).
    x = logits.reshape(N, C, HW)
    lab = labels.reshape(N, 1, HW).astype(jnp.int32)

    # Pixels-per-block: multiple of 128, capped at tile_lanes, padded if needed.
    TL = min(_round_up(tile_lanes, 128), _round_up(HW, 128))
    HW_pad = _round_up(HW, TL)
    if HW_pad != HW:
        pad = HW_pad - HW
        x = jnp.pad(x, ((0, 0), (0, 0), (0, pad)))
        lab = jnp.pad(lab, ((0, 0), (0, 0), (0, pad)))

    grid = (N, HW_pad // TL)

    per_elem = pl.pallas_call(
        functools.partial(_focal_kernel, gamma=float(gamma)),
        out_shape=jax.ShapeDtypeStruct((N, 1, HW_pad), jnp.float32),
        grid_spec=pltpu.PrefetchScalarGridSpec(
            num_scalar_prefetch=0,
            grid=grid,
            in_specs=[
                pl.BlockSpec((None, C, TL), lambda n, j: (n, 0, j)),
                pl.BlockSpec((None, 1, TL), lambda n, j: (n, 0, j)),
            ],
            out_specs=pl.BlockSpec((None, 1, TL), lambda n, j: (n, 0, j)),
        ),
        compiler_params=pltpu.CompilerParams(
            dimension_semantics=("parallel", "parallel")),
    )(x, lab)

    per_elem = per_elem[:, 0, :HW].reshape(N, H, W)
    if reduce:
        return jnp.mean(per_elem)
    return per_elem


def _reference(logits, labels, gamma=2.0, reduce=True):
    # pure-JAX reference mirroring the PyTorch module
    x = logits.astype(jnp.float32)
    scores = jax.nn.softmax(x, axis=1)
    log_sm = jax.nn.log_softmax(x, axis=1)
    log_score = ((1.0 - scores) ** gamma) * log_sm
    gathered = jnp.take_along_axis(log_score, labels[:, None, :, :], axis=1)[:, 0]
    per_elem = -gathered
    return jnp.mean(per_elem) if reduce else per_elem


if __name__ == "__main__":
    key = jax.random.PRNGKey(0)
    k1, k2, k3, k4 = jax.random.split(key, 4)

    gamma = 2.0

    # Primary shapes (consistent with the module's typical use).
    N, C, H, W = 2, 4, 16, 16
    logits = jax.random.normal(k1, (N, C, H, W), dtype=jnp.float32)
    labels = jax.random.randint(k2, (N, H, W), 0, C, dtype=jnp.int32)

    out_reduced = softmax_focal_loss(logits, labels, gamma=gamma, reduce=True)
    out_per_elem = softmax_focal_loss(logits, labels, gamma=gamma, reduce=False)
    jax.block_until_ready((out_reduced, out_per_elem))

    ref_reduced = _reference(logits, labels, gamma=gamma, reduce=True)
    ref_per_elem = _reference(logits, labels, gamma=gamma, reduce=False)

    assert jnp.allclose(out_reduced, ref_reduced, atol=1e-5, rtol=1e-5)
    assert jnp.allclose(out_per_elem, ref_per_elem, atol=1e-5, rtol=1e-5)

    # Non-128-multiple spatial size exercises the padding path.
    N2, C2, H2, W2 = 2, 4, 10, 10
    logits2 = jax.random.normal(k3, (N2, C2, H2, W2), dtype=jnp.float32)
    labels2 = jax.random.randint(k4, (N2, H2, W2), 0, C2, dtype=jnp.int32)

    out2 = softmax_focal_loss(logits2, labels2, gamma=gamma, reduce=False)
    jax.block_until_ready(out2)
    ref2 = _reference(logits2, labels2, gamma=gamma, reduce=False)
    assert jnp.allclose(out2, ref2, atol=1e-5, rtol=1e-5)

    print("KERNEL_OK")
</pallas_src>

<mosaic_0001>
module attributes {stable_mosaic.version = 11 : i64} {
  func.func @_focal_kernel(%arg0: i32, %arg1: i32, %arg2: memref<1x4x256xf32, #tpu.memory_space<vmem>>, %arg3: memref<1x1x256xi32, #tpu.memory_space<vmem>>, %arg4: memref<1x1x256xf32, #tpu.memory_space<vmem>>) attributes {dimension_semantics = [#tpu.dimension_semantics<parallel>, #tpu.dimension_semantics<parallel>], iteration_bounds = array<i64: 2, 1>, scalar_prefetch = 0 : i64, scratch_operands = 0 : i64, tpu.core_type = #tpu.core_type<tc>, window_params = [{transform_indices = @transform_0, window_bounds = array<i64: 1, 4, 256>}, {transform_indices = @transform_1, window_bounds = array<i64: 1, 1, 256>}, {transform_indices = @transform_2, window_bounds = array<i64: 1, 1, 256>}]} {
    %c0 = arith.constant 0 : index
    %c0_0 = arith.constant 0 : index
    %c0_1 = arith.constant 0 : index
    %0 = vector.load %arg2[%c0, %c0_0, %c0_1] : memref<1x4x256xf32, #tpu.memory_space<vmem>>, vector<1x4x256xf32>
    %1 = vector.shape_cast %0 : vector<1x4x256xf32> to vector<4x256xf32>
    %cst = arith.constant dense<0xFF800000> : vector<256xf32>
    %2 = vector.multi_reduction <maximumf>, %1, %cst [0] : vector<4x256xf32> to vector<256xf32>
    %3 = vector.shape_cast %2 : vector<256xf32> to vector<1x256xf32>
    %4 = vector.broadcast %3 : vector<1x256xf32> to vector<4x256xf32>
    %5 = arith.subf %1, %4 : vector<4x256xf32>
    %6 = math.exp %5 : vector<4x256xf32>
    %cst_2 = arith.constant dense<0.000000e+00> : vector<256xf32>
    %7 = vector.multi_reduction <add>, %6, %cst_2 [0] : vector<4x256xf32> to vector<256xf32>
    %8 = vector.shape_cast %7 : vector<256xf32> to vector<1x256xf32>
    %9 = math.log %8 : vector<1x256xf32>
    %c0_3 = arith.constant 0 : index
    %c0_4 = arith.constant 0 : index
    %c0_5 = arith.constant 0 : index
    %10 = vector.load %arg3[%c0_3, %c0_4, %c0_5] : memref<1x1x256xi32, #tpu.memory_space<vmem>>, vector<1x1x256xi32>
    %11 = vector.shape_cast %10 : vector<1x1x256xi32> to vector<1x256xi32>
    %12 = tpu.iota {dimensions = array<i32: 0>} : vector<4x256xi32>
    %13 = vector.broadcast %11 : vector<1x256xi32> to vector<4x256xi32>
    %14 = arith.cmpi eq, %12, %13 : vector<4x256xi32>
    %15 = arith.extui %14 : vector<4x256xi1> to vector<4x256xi32>
    %16 = arith.sitofp %15 : vector<4x256xi32> to vector<4x256xf32>
    %17 = arith.mulf %16, %5 : vector<4x256xf32>
    %cst_6 = arith.constant dense<0.000000e+00> : vector<256xf32>
    %18 = vector.multi_reduction <add>, %17, %cst_6 [0] : vector<4x256xf32> to vector<256xf32>
    %19 = vector.shape_cast %18 : vector<256xf32> to vector<1x256xf32>
    %20 = arith.subf %19, %9 : vector<1x256xf32>
    %21 = math.exp %20 : vector<1x256xf32>
    %cst_7 = arith.constant 1.000000e+00 : f32
    %22 = vector.broadcast %cst_7 : f32 to vector<1x256xf32>
    %23 = arith.subf %22, %21 : vector<1x256xf32>
    %cst_8 = arith.constant 1.000000e+00 : f32
    %24 = vector.broadcast %cst_8 : f32 to vector<1x256xf32>
    %25 = arith.mulf %24, %23 : vector<1x256xf32>
    %26 = arith.mulf %25, %23 : vector<1x256xf32>
    %27 = arith.mulf %26, %20 : vector<1x256xf32>
    %cst_9 = arith.constant 0.000000e+00 : f32
    %28 = vector.broadcast %cst_9 : f32 to vector<1x256xf32>
    %29 = arith.subf %28, %27 : vector<1x256xf32>
    %c0_10 = arith.constant 0 : index
    %c0_11 = arith.constant 0 : index
    %c0_12 = arith.constant 0 : index
    %30 = vector.load %arg4[%c0_10, %c0_11, %c0_12] : memref<1x1x256xf32, #tpu.memory_space<vmem>>, vector<1x1x256xf32>
    %31 = vector.shape_cast %30 : vector<1x1x256xf32> to vector<1x256xf32>
    %32 = vector.shape_cast %29 : vector<1x256xf32> to vector<1x1x256xf32>
    tpu.vector_store %arg4[%c0_10, %c0_11, %c0_12], %32 {strides = array<i32>} : memref<1x1x256xf32, #tpu.memory_space<vmem>>, vector<1x1x256xf32>,
    return
  }
  func.func @transform_0(%arg0: i32, %arg1: i32) -> (i32, i32, i32) {
    %c0_i32 = arith.constant 0 : i32
    %c0_i32_0 = arith.constant 0 : i32
    return %arg0, %c0_i32, %arg1 : i32, i32, i32
  }
  func.func @transform_1(%arg0: i32, %arg1: i32) -> (i32, i32, i32) {
    %c0_i32 = arith.constant 0 : i32
    %c0_i32_0 = arith.constant 0 : i32
    return %arg0, %c0_i32, %arg1 : i32, i32, i32
  }
  func.func @transform_2(%arg0: i32, %arg1: i32) -> (i32, i32, i32) {
    %c0_i32 = arith.constant 0 : i32
    %c0_i32_0 = arith.constant 0 : i32
    return %arg0, %c0_i32, %arg1 : i32, i32, i32
  }
}

</mosaic_0001>

<llo_original>
// kernel: tpu_custom_call.1
$region0: #{tpu_custom_call.1}
  #allocation0 [shape = 'u32[]', space=smem, size = 0x4, offset = 0x4, fixed_abs, tag = 'smem constant byte address 0x4 - core index']
  #allocation1 [shape = 'u32[144,128]{1,0:T(1,128)}', space=vmem, size = 0x12000, scoped, tag = 'internal scratch']
  %s0 = inlined_call_operand.hbm [shape: f32[2,4,256], index: 0, kind: input, shape index: {}]
  %s1 = inlined_call_operand.hbm [shape: s32[2,1,256], index: 1, kind: input, shape index: {}]
  %s2 = inlined_call_operand.hbm [shape: f32[2,1,256], index: 2, kind: output, shape index: {}]
  %s3 = sld [smem:[#allocation0]]
  $region49: #{tpu_custom_call.1} parent=0
    _
  %s5 = ssub.s32 1, %s3
  %s6 = scalar_select 0, %s5, %s3
  $region1: #{tpu_custom_call.1} parent=0
    #allocation2 [shape = 'u8[8192]{0}', space=vmem, size = 0x2000, scoped, tag = 'input window, operand 0']
    #allocation3 [shape = 's32[2]{0}', space=sflag, size = 0x8, scoped, tag = 'scoped memory for tpu_custom_call.1']
    #allocation4 [shape = 's32[2]{0}', space=sflag, size = 0x8, scoped, tag = 'scoped memory for tpu_custom_call.1']
    #allocation5 [shape = 'u8[2048]{0}', space=vmem, size = 0x800, scoped, tag = 'input window, operand 1']
    #allocation6 [shape = 's32[2]{0}', space=sflag, size = 0x8, scoped, tag = 'scoped memory for tpu_custom_call.1']
    #allocation7 [shape = 'u8[2048]{0}', space=vmem, size = 0x800, scoped, tag = 'output window, operand 0']
    %7 = vsyncpa [#allocation3], 0
    %s8 = scalar_lea.sflag [#allocation3], 1
    %9 = vsyncpa %s8, 0
    %10 = vsyncpa [#allocation6], 0
    %s11 = scalar_lea.sflag [#allocation6], 1
    %12 = vsyncpa %s11, 0
    %13 = vsyncpa [#allocation4], 0
    %s14 = scalar_lea.sflag [#allocation4], 1
    %15 = vsyncpa %s14, 0
    loop: start=0, step=1, limit=4
    $region2: #{tpu_custom_call.1} parent=1 // loop_pre_header
      _
    $region3: #{tpu_custom_call.1} parent=1 // loop_header
      %s17 = sphi 0, %s21
      %p18 = scmp.ge.s32.totalorder %s17, 4
      %s24 = sphi 0, %s36
      %s25 = sphi 0, %s32
      %s26 = sphi 0, %s24
      %s27 = sphi 0, %s25
      %s28 = sphi 0, %s26
      %s29 = sphi 0, %s27
      %s41 = sphi 0, %s43
      %s44 = sphi 0, %s41
      %s45 = sphi 0, %s44
      %s61 = sphi 0, %s45
      %s69 = sphi 0, %s71
      %s72 = sphi 0, %s69
      %s73 = sphi 0, %s72
      %s89 = sphi 0, %s73
      %s97 = sphi 0, %s99
      %s100 = sphi 0, %s97
      %s101 = sphi 0, %s100
      %s117 = sphi 0, %s101
    $region4: #{tpu_custom_call.1} parent=1 // loop_header_branch
      %20 = sbr.rel (%p18) target = $region8
    $region5: #{tpu_custom_call.1} parent=1 // loop_body
      %s22 = ssub.s32 %s17, 1
      %s23 = ssub.s32 %s17, 2
      %s30 = sadd.s32 1, %s25
      %p31 = scmp.ge.s32.totalorder %s30, 1
      %s32 = scalar_select %p31, 0, %s30
      %s33 = sadd.s32 1, %s24
      %s34 = scalar_select %p31, %s33, %s24
      %p35 = scmp.ge.s32.totalorder %s34, 2
      %s36 = scalar_select %p35, 0, %s34
      %s37 = ssub.s32 %s24, %s36
      %s38 = ssub.s32 %s25, %s32
      %s39 = sor.u32 %s37, %s38
      %p40 = scmp.eq.s32.totalorder %s39, 0
      %s42 = sadd.s32 %s41, 1
      %s43 = scalar_select %p40, %s41, %s42
      %p46 = pneg %p40
      %p47 = scmp.eq.s32.totalorder %s17, 1
      %p48 = por %p46, %p47
      %p49 = scmp.ne.s32.totalorder %s41, %s44
      %p50 = scmp.eq.s32.totalorder %s17, 0
      %p51 = por %p49, %p50
      %p52 = scmp.ne.s32.totalorder %s41, %s44
      %p53 = scmp.eq.s32.totalorder %s22, 1
      %p54 = por %p52, %p53
      %p55 = scmp.ne.s32.totalorder %s44, %s45
      %p56 = scmp.eq.s32.totalorder %s22, 0
      %p57 = por %p55, %p56
      %p58 = scmp.ne.s32.totalorder %s44, %s45
      %p59 = scmp.eq.s32.totalorder %s23, 1
      %p60 = por %p58, %p59
      %p62 = scmp.ne.s32.totalorder %s45, %s61
      %p63 = scmp.eq.s32.totalorder %s23, 0
      %p64 = por %p62, %p63
      %s65 = ssub.s32 %s24, %s36
      %s66 = ssub.s32 %s25, %s32
      %s67 = sor.u32 %s65, %s66
      %p68 = scmp.eq.s32.totalorder %s67, 0
      %s70 = sadd.s32 %s69, 1
      %s71 = scalar_select %p68, %s69, %s70
      %p74 = pneg %p68
      %p75 = scmp.eq.s32.totalorder %s17, 1
      %p76 = por %p74, %p75
      %p77 = scmp.ne.s32.totalorder %s69, %s72
      %p78 = scmp.eq.s32.totalorder %s17, 0
      %p79 = por %p77, %p78
      %p80 = scmp.ne.s32.totalorder %s69, %s72
      %p81 = scmp.eq.s32.totalorder %s22, 1
      %p82 = por %p80, %p81
      %p83 = scmp.ne.s32.totalorder %s72, %s73
      %p84 = scmp.eq.s32.totalorder %s22, 0
      %p85 = por %p83, %p84
      %p86 = scmp.ne.s32.totalorder %s72, %s73
      %p87 = scmp.eq.s32.totalorder %s23, 1
      %p88 = por %p86, %p87
      %p90 = scmp.ne.s32.totalorder %s73, %s89
      %p91 = scmp.eq.s32.totalorder %s23, 0
      %p92 = por %p90, %p91
      %s93 = ssub.s32 %s24, %s36
      %s94 = ssub.s32 %s25, %s32
      %s95 = sor.u32 %s93, %s94
      %p96 = scmp.eq.s32.totalorder %s95, 0
      %s98 = sadd.s32 %s97, 1
      %s99 = scalar_select %p96, %s97, %s98
      %p102 = pneg %p96
      %p103 = scmp.eq.s32.totalorder %s17, 1
      %p104 = por %p102, %p103
      %p105 = scmp.ne.s32.totalorder %s97, %s100
      %p106 = scmp.eq.s32.totalorder %s17, 0
      %p107 = por %p105, %p106
      %p108 = scmp.ne.s32.totalorder %s97, %s100
      %p109 = scmp.eq.s32.totalorder %s22, 1
      %p110 = por %p108, %p109
      %p111 = scmp.ne.s32.totalorder %s100, %s101
      %p112 = scmp.eq.s32.totalorder %s22, 0
      %p113 = por %p111, %p112
      %p114 = scmp.ne.s32.totalorder %s100, %s101
      %p115 = scmp.eq.s32.totalorder %s23, 1
      %p116 = por %p114, %p115
      %p118 = scmp.ne.s32.totalorder %s101, %s117
      %p119 = scmp.eq.s32.totalorder %s23, 0
      %p120 = por %p118, %p119
      %p121 = scmp.le.s32.totalorder 1, %s17
      %p122 = scmp.lt.s32.totalorder %s17, 3
      %p123 = pnand %p121, %p122
      %p124 = pneg %p123
      // Predicated region
      $region9: #{tpu_custom_call.1} parent=5 // pred_check
        _
      $region10: #{tpu_custom_call.1} parent=5 // pred_check_branch
        %126 = sbr.rel (%p123) target = $region12
      $region11: #{tpu_custom_call.1} parent=5 // pred_region
        %s127 = ssub.s32 %s17, 1
      $region12: #{tpu_custom_call.1} parent=5 // pred_fallthru
        _
      %p128 = scmp.lt.s32.totalorder %s17, 2
      // Predicated region
      $region13: #{tpu_custom_call.1} parent=5 // pred_check
        %p129 = pneg %p128
      $region14: #{tpu_custom_call.1} parent=5 // pred_check_branch
        %131 = sbr.rel (%p129) target = $region16
      $region15: #{tpu_custom_call.1} parent=5 // pred_region
        // Predicated region
        $region17: #{tpu_custom_call.1} parent=15 // pred_check
          %p132 = pneg %p51
        $region18: #{tpu_custom_call.1} parent=15 // pred_check_branch
          %134 = sbr.rel (%p132) target = $region20
        $region19: #{tpu_custom_call.1} parent=15 // pred_region
          %s135 = sand.u32 %s41, 1
          %s136 = scalar_lea.sflag [#allocation3], %s135
          %s137 = sand.u32 %s41, 1
          %s138 = smul.addr %s137, 8
          %s139 = scalar_lea.vmem [#allocation2], %s138
          %s140 = smul.u32 2, %s25
          %s142 = ssub.s32 128, 128
          %143 = vsyncadd %s136, %s142
          %s144 = smul.addr %s24, 2
          %s145 = sadd.s32 %s140, %s144
          %s146 = smul.addr %s145, 64
          %s147 = scalar_lea.hbm %s0, %s146
          %s149 = sshll.u32 %s139, 4
          %s150 = int_to_ptr.vmem [resolvable:$true] %s149
          %152 = dma.hbm_to_vmem [thread:$0]  %s147, 128, %s150, %s136
        $region20: #{tpu_custom_call.1} parent=15 // pred_fallthru
          _
        // Predicated region
        $region21: #{tpu_custom_call.1} parent=15 // pred_check
          %p153 = pneg %p79
        $region22: #{tpu_custom_call.1} parent=15 // pred_check_branch
          %155 = sbr.rel (%p153) target = $region24
        $region23: #{tpu_custom_call.1} parent=15 // pred_region
          %s156 = sand.u32 %s69, 1
          %s157 = scalar_lea.sflag [#allocation6], %s156
          %s158 = sand.u32 %s69, 1
          %s159 = smul.addr %s158, 2
          %s160 = scalar_lea.vmem [#allocation5], %s159
          %s161 = smul.u32 2, %s25
          %s163 = ssub.s32 32, 32
          %164 = vsyncadd %s157, %s163
          %s165 = smul.addr %s24, 2
          %s166 = sadd.s32 %s161, %s165
          %s167 = smul.addr %s166, 16
          %s168 = scalar_lea.hbm %s1, %s167
          %s170 = sshll.u32 %s160, 4
          %s171 = int_to_ptr.vmem [resolvable:$true] %s170
          %173 = dma.hbm_to_vmem [thread:$0]  %s168, 32, %s171, %s157
        $region24: #{tpu_custom_call.1} parent=15 // pred_fallthru
          _
      $region16: #{tpu_custom_call.1} parent=5 // pred_fallthru
        _
      %p174 = scmp.le.s32.totalorder 1, %s17
      %p175 = scmp.lt.s32.totalorder %s17, 3
      %p176 = pnand %p174, %p175
      %p177 = pneg %p176
      // Predicated region
      $region25: #{tpu_custom_call.1} parent=5 // pred_check
        _
      $region26: #{tpu_custom_call.1} parent=5 // pred_check_branch
        %179 = sbr.rel (%p176) target = $region28
      $region27: #{tpu_custom_call.1} parent=5 // pred_region
        %s180 = ssub.s32 %s17, 1
        %s181 = sand.u32 %s44, 1
        %s182 = scalar_lea.sflag [#allocation3], %s181
        %s183 = sand.u32 %s44, 1
        %s184 = smul.addr %s183, 8
        %s185 = scalar_lea.vmem [#allocation2], %s184
        // Predicated region
        $region29: #{tpu_custom_call.1} parent=27 // pred_check
          %p186 = pneg %p57
        $region30: #{tpu_custom_call.1} parent=27 // pred_check_branch
          %188 = sbr.rel (%p186) target = $region32
        $region31: #{tpu_custom_call.1} parent=27 // pred_region
          %189 = dma.done %s182, 128
        $region32: #{tpu_custom_call.1} parent=27 // pred_fallthru
          _
        %s190 = sand.u32 %s72, 1
        %s191 = scalar_lea.sflag [#allocation6], %s190
        %s192 = sand.u32 %s72, 1
        %s193 = smul.addr %s192, 2
        %s194 = scalar_lea.vmem [#allocation5], %s193
        // Predicated region
        $region33: #{tpu_custom_call.1} parent=27 // pred_check
          %p195 = pneg %p85
        $region34: #{tpu_custom_call.1} parent=27 // pred_check_branch
          %197 = sbr.rel (%p195) target = $region36
        $region35: #{tpu_custom_call.1} parent=27 // pred_region
          %198 = dma.done %s191, 32
        $region36: #{tpu_custom_call.1} parent=27 // pred_fallthru
          _
        %s199 = sand.u32 %s44, 1
        %s200 = scalar_lea.sflag [#allocation3], %s199
        %s201 = sand.u32 %s44, 1
        %s202 = smul.addr %s201, 8
        %s203 = scalar_lea.vmem [#allocation2], %s202
        %p204 = pneg %p57
        %p205 = pneg %p54
        %s206 = sand.u32 %s72, 1
        %s207 = scalar_lea.sflag [#allocation6], %s206
        %s208 = sand.u32 %s72, 1
        %s209 = smul.addr %s208, 2
        %s210 = scalar_lea.vmem [#allocation5], %s209
        %p211 = pneg %p85
        %p212 = pneg %p82
        %p213 = pneg %p113
        %p214 = pneg %p110
        %s215 = sand.u32 %s100, 1
        %s216 = scalar_lea.sflag [#allocation4], %s215
        %s217 = sand.u32 %s100, 1
        %s218 = smul.addr %s217, 2
        %s219 = scalar_lea.vmem [#allocation7], %s218
        %s220 = smul.u32 2, %s27
        %s221 = smul.u32 2, %s27
        %s222 = smul.u32 2, %s27
        %v223 = vld [vmem:[%s185] sm:$0xff]
        %v225 = vcombine.high %v223, %v223
        %vm227 = vcmask 1043456
        %v228 = vsel %vm227, %v223, -inf
        %v229 = vrot.slane %v228, 4
        %v230 = vmax.f32 %v228, %v229
        %v231 = vrot.slane %v230, 2
        %v232 = vmax.f32 %v230, %v231
        %v233 = vrot.slane %v232, 1
        %v234 = vmax.f32 %v232, %v233
        %v235 = vsel %vm227, %v225, -inf
        %v236 = vrot.slane %v235, 4
        %v237 = vmax.f32 %v235, %v236
        %v238 = vrot.slane %v237, 2
        %v239 = vmax.f32 %v237, %v238
        %v240 = vrot.slane %v239, 1
        %v241 = vmax.f32 %v239, %v240
        %v244 = vcombine.low %v234, %v241
        %v246 = vsub.f32 %v223, %v244
        %v247 = vmul.f32 %v246, 1.442695
        %v248 = vpow.pop %v247
        %v250 = vcombine.high %v248, %v248
        %v252 = vsel %vm227, %v248, 0.0
        %v253 = vrot.slane %v252, 4
        %v254 = vadd.f32 %v252, %v253
        %v255 = vrot.slane %v254, 2
        %v256 = vadd.f32 %v254, %v255
        %v257 = vrot.slane %v256, 1
        %v258 = vadd.f32 %v256, %v257
        %v259 = vsel %vm227, %v250, 0.0
        %v260 = vrot.slane %v259, 4
        %v261 = vadd.f32 %v259, %v260
        %v262 = vrot.slane %v261, 2
        %v263 = vadd.f32 %v261, %v262
        %v264 = vrot.slane %v263, 1
        %v265 = vadd.f32 %v263, %v264
        %v266 = vlog2.pop %v258
        %v267 = vmul.f32 %v266, 0.6931472
        %v268 = vlog2.pop %v265
        %v269 = vmul.f32 %v268, 0.6931472
        %v270 = vld [vmem:[%s194] sm:$0x3]
        %v271 = vlaneseq
        %v272 = vshrl.u32 %v271, 7
        %v273 = vlaneseq
        %v274 = vshrl.u32 %v273, 7
        %v275 = vsub.s32 0, %v274
        %v276 = vrot.slane %v270, %v275
        %v277 = vlaneseq
        %v278 = vshrl.u32 %v277, 7
        %v279 = vsub.s32 1, %v278
        %v280 = vrot.slane %v270, %v279
        %vm281 = vcmp.eq.s32.totalorder %v272, %v276
        %vm282 = vcmp.eq.s32.totalorder %v272, %v280
        %v283 = vsel %vm281, 1, 0
        %v284 = vsel %vm282, 1, 0
        %v285 = vcvt.s32.f32 %v283
        %v286 = vcvt.s32.f32 %v284
        %v288 = vcombine.high %v246, %v246
        %v290 = vmul.f32 %v285, %v246
        %v291 = vmul.f32 %v286, %v288
        %v292 = vsel %vm227, %v290, 0.0
        %v293 = vrot.slane %v292, 4
        %v294 = vadd.f32 %v292, %v293
        %v295 = vrot.slane %v294, 2
        %v296 = vadd.f32 %v294, %v295
        %v297 = vrot.slane %v296, 1
        %v298 = vadd.f32 %v296, %v297
        %v299 = vsel %vm227, %v291, 0.0
        %v300 = vrot.slane %v299, 4
        %v301 = vadd.f32 %v299, %v300
        %v302 = vrot.slane %v301, 2
        %v303 = vadd.f32 %v301, %v302
        %v304 = vrot.slane %v303, 1
        %v305 = vadd.f32 %v303, %v304
        %v306 = vsub.f32 %v298, %v267
        %v307 = vsub.f32 %v305, %v269
        %v308 = vmul.f32 %v306, 1.442695
        %v309 = vpow.pop %v308
        %v310 = vmul.f32 %v307, 1.442695
        %v311 = vpow.pop %v310
        %v312 = vsub.f32 1.0, %v309
        %v313 = vsub.f32 1.0, %v311
        %v314 = vmul.f32 %v312, %v312
        %v315 = vmul.f32 %v313, %v313
        %v316 = vmul.f32 %v314, %v306
        %v317 = vmul.f32 %v315, %v307
        %v318 = vsub.f32 0.0, %v316
        %v319 = vsub.f32 0.0, %v317
        %v322 = vcombine.low %v318, %v319
        %v324 = vunpack.c.l.s4 1966171168
        %v325 = vunpack.c.0.s8 %v324
        %v326 = vlaneseq
        %v327 = vshrl.u32 %v326, 7
        %v328 = vsub.s32 %v325, %v327
        %v329 = vrot.slane %v322, %v328
        %v331 = vunpack.c.l.s4 1966171168
        %v332 = vunpack.c.0.s8 %v331
        %v333 = vlaneseq
        %v334 = vshrl.u32 %v333, 7
        %v335 = vsub.s32 %v332, %v334
        %v336 = vrot.slane %v329, %v335
        %v338 = vlaneseq
        %vm339 = vcmp.ge.s32.totalorder %v338, 0
        %vm340 = vcmp.lt.s32.totalorder %v338, 256
        %vm341 = vmand %vm339, %vm340
        %342 = vst.msk [vmem:[%s219] sm:$0x3] %vm341, %v336
        %s343 = sand.u32 %s100, 1
        %s344 = scalar_lea.sflag [#allocation4], %s343
        %s345 = sand.u32 %s100, 1
        %s346 = smul.addr %s345, 2
        %s347 = scalar_lea.vmem [#allocation7], %s346
        // Predicated region
        $region37: #{tpu_custom_call.1} parent=27 // pred_check
          %p348 = pneg %p110
        $region38: #{tpu_custom_call.1} parent=27 // pred_check_branch
          %350 = sbr.rel (%p348) target = $region40
        $region39: #{tpu_custom_call.1} parent=27 // pred_region
          %s351 = smul.u32 2, %s27
          %s353 = ssub.s32 32, 32
          %354 = vsyncadd %s344, %s353
          %s355 = smul.addr %s26, 2
          %s356 = sadd.s32 %s351, %s355
          %s357 = smul.addr %s356, 16
          %s358 = scalar_lea.hbm %s2, %s357
          %s360 = sshll.u32 %s347, 4
          %s361 = int_to_ptr.vmem [resolvable:$true] %s360
          %363 = dma.vmem_to_hbm [thread:$0]  %s361, 32, %s358, %s344
        $region40: #{tpu_custom_call.1} parent=27 // pred_fallthru
          _
      $region28: #{tpu_custom_call.1} parent=5 // pred_fallthru
        _
      %p364 = scmp.le.s32.totalorder 2, %s17
      // Predicated region
      $region41: #{tpu_custom_call.1} parent=5 // pred_check
        %p365 = pneg %p364
      $region42: #{tpu_custom_call.1} parent=5 // pred_check_branch
        %367 = sbr.rel (%p365) target = $region44
      $region43: #{tpu_custom_call.1} parent=5 // pred_region
        %s368 = ssub.s32 %s17, 2
        // Predicated region
        $region45: #{tpu_custom_call.1} parent=43 // pred_check
          %p369 = pneg %p116
        $region46: #{tpu_custom_call.1} parent=43 // pred_check_branch
          %371 = sbr.rel (%p369) target = $region48
        $region47: #{tpu_custom_call.1} parent=43 // pred_region
          %s372 = sand.u32 %s101, 1
          %s373 = scalar_lea.sflag [#allocation4], %s372
          %s374 = sand.u32 %s101, 1
          %s375 = smul.addr %s374, 2
          %s376 = scalar_lea.vmem [#allocation7], %s375
          %377 = dma.done %s373, 32
        $region48: #{tpu_custom_call.1} parent=43 // pred_fallthru
          _
      $region44: #{tpu_custom_call.1} parent=5 // pred_fallthru
        _
    $region6: #{tpu_custom_call.1} parent=1 // loop_footer
      %s21 = sadd.s32 1, %s17
    $region7: #{tpu_custom_call.1} parent=1 // loop_footer_branch
      %16 = sbr.rel target = $region3
    $region8: #{tpu_custom_call.1} parent=1 // loop_exit
      _
    %378 = vsyncpa [#allocation3], 1
    %s379 = scalar_lea.sflag [#allocation3], 1
    %380 = vsyncpa %s379, 1
    %381 = vsyncpa [#allocation6], 1
    %s382 = scalar_lea.sflag [#allocation6], 1
    %383 = vsyncpa %s382, 1
    %384 = vsyncpa [#allocation4], 1
    %s385 = scalar_lea.sflag [#allocation4], 1
    %386 = vsyncpa %s385, 1

</llo_original>
